<compile_context>
chip_gen: v5e
topology: v5e:2x2
jax: 0.10.0
libtpu: 0.0.40
codegen_flags: <defaults>
</compile_context>

<pallas_src>
import jax
import jax.numpy as jnp
from jax.experimental import pallas as pl
from jax.experimental.pallas import tpu as pltpu

LANE = 128  # TPU vreg lane width


def action_mlp_kernel(x_ref, w1_ref, b1_ref, w2_ref, b2_ref, o_ref):
    # x_ref : (B, S, D) f32
    # w1_ref: (D, H)    f32  (original Linear1 weight, un-tiled)
    # b1_ref: (1, H)    f32
    # w2_ref: (H, Cp)   f32  (zero-padded to lane-dense Cp, multiple of 128)
    # b2_ref: (1, Cp)   f32  (zero-padded)
    # o_ref : (B, Cp)   f32  (padded; columns >= C are exact zeros + b2 pad = 0)
    xm = jnp.mean(x_ref[...], axis=1)                       # seq mean: (B, D)
    h = jnp.dot(xm, w1_ref[...], preferred_element_type=jnp.float32)
    h = jnp.maximum(h + b1_ref[...], 0.0)                   # bias + ReLU (f32 VPU)
    out = jnp.dot(h, w2_ref[...], preferred_element_type=jnp.float32)
    o_ref[...] = out + b2_ref[...]                          # lane-dense f32 store


def prepare_params(w1, b1, w2, b2):
    """One-time (init / load-time) parameter prep. NOT on the per-call path."""
    H = w1.shape[1]
    C = w2.shape[1]
    Cp = max(LANE, pl.cdiv(C, LANE) * LANE)                 # lane-dense class dim
    w1p = jnp.asarray(w1, jnp.float32)                      # (D, H)
    b1p = jnp.asarray(b1, jnp.float32).reshape(1, H)        # (1, H)
    w2p = jnp.zeros((H, Cp), jnp.float32).at[:, :C].set(w2)  # (H, Cp)
    b2p = jnp.zeros((1, Cp), jnp.float32).at[:, :C].set(b2)  # (1, Cp)
    return w1p, b1p, w2p, b2p, C


def action_mlp_padded(x, w1p, b1p, w2p, b2p):
    """x: (B, S, D) f32; preprocessed params from prepare_params().
    Returns the lane-dense PADDED logits (B, Cp); valid classes are [:, :C]."""
    B, S, D = x.shape
    H = w1p.shape[1]
    Cp = w2p.shape[1]

    flops = B * S * D + 2 * B * (D * H + H * Cp)            # mean + 2 matmuls
    bytes_accessed = 4 * (x.size + w1p.size + b1p.size + w2p.size + b2p.size
                          + B * Cp)

    vmem = pltpu.MemorySpace.VMEM
    return pl.pallas_call(
        action_mlp_kernel,
        out_shape=jax.ShapeDtypeStruct((B, Cp), jnp.float32),
        in_specs=[
            pl.BlockSpec(memory_space=vmem),   # x
            pl.BlockSpec(memory_space=vmem),   # w1
            pl.BlockSpec(memory_space=vmem),   # b1
            pl.BlockSpec(memory_space=vmem),   # w2 (padded)
            pl.BlockSpec(memory_space=vmem),   # b2 (padded)
        ],
        out_specs=pl.BlockSpec(memory_space=vmem),
        cost_estimate=pl.CostEstimate(
            flops=flops, transcendentals=0, bytes_accessed=bytes_accessed),
    )(x, w1p, b1p, w2p, b2p)


def reference_action_mlp(x, w1, b1, w2, b2):
    xm = jnp.mean(x, axis=1)
    h = jnp.maximum(xm @ w1 + b1, 0.0)
    return h @ w2 + b2


if __name__ == "__main__":
    # Shapes consistent with ActionMLP: token_dim=32, seq_len=8, hidden_dim=32,
    # num_classes=16, batch=4.
    B, S, D, H, C = 4, 8, 32, 32, 16

    key = jax.random.PRNGKey(0)
    kx, k1, k2, k3, k4 = jax.random.split(key, 5)

    x = jax.random.normal(kx, (B, S, D), dtype=jnp.float32)

    # Deterministic parameter init (Kaiming-uniform-ish scale, like nn.Linear).
    bound1 = 1.0 / (D ** 0.5)
    w1 = jax.random.uniform(k1, (D, H), jnp.float32, -bound1, bound1)
    b1 = jax.random.uniform(k2, (H,), jnp.float32, -bound1, bound1)
    bound2 = 1.0 / (H ** 0.5)
    w2 = jax.random.uniform(k3, (H, C), jnp.float32, -bound2, bound2)
    b2 = jax.random.uniform(k4, (C,), jnp.float32, -bound2, bound2)

    # One-time param prep (init-time), then the per-call path is pure kernel.
    w1p, b1p, w2p, b2p, num_classes = prepare_params(w1, b1, w2, b2)
    w1p, b1p, w2p, b2p = jax.block_until_ready((w1p, b1p, w2p, b2p))

    out_padded = jax.block_until_ready(action_mlp_padded(x, w1p, b1p, w2p, b2p))
    out = out_padded[:, :num_classes]            # slice only for the check
    ref = reference_action_mlp(x, w1, b1, w2, b2)

    assert out_padded.shape == (B, max(LANE, C))
    assert out.shape == (B, C)
    # All-f32 kernel path -> tight tolerance vs f32 reference.
    assert jnp.allclose(out, ref, atol=1e-5, rtol=1e-5), "mismatch vs reference"
    # Padded class columns must be exact zeros (safe to keep end-to-end).
    assert jnp.all(out_padded[:, num_classes:] == 0.0)

    print("KERNEL_OK")
</pallas_src>

<mosaic_0001>
module attributes {stable_mosaic.version = 11 : i64} {
  func.func @action_mlp_kernel(%arg0: memref<4x8x32xf32, #tpu.memory_space<vmem>>, %arg1: memref<32x32xf32, #tpu.memory_space<vmem>>, %arg2: memref<1x32xf32, #tpu.memory_space<vmem>>, %arg3: memref<32x128xf32, #tpu.memory_space<vmem>>, %arg4: memref<1x128xf32, #tpu.memory_space<vmem>>, %arg5: memref<4x128xf32, #tpu.memory_space<vmem>>) attributes {dimension_semantics = [], scalar_prefetch = 0 : i64, scratch_operands = 0 : i64, tpu.core_type = #tpu.core_type<tc>} {
    %c0 = arith.constant 0 : index
    %c0_0 = arith.constant 0 : index
    %c0_1 = arith.constant 0 : index
    %0 = vector.load %arg0[%c0, %c0_0, %c0_1] : memref<4x8x32xf32, #tpu.memory_space<vmem>>, vector<4x8x32xf32>
    %cst = arith.constant dense<0.000000e+00> : vector<4x32xf32>
    %1 = vector.multi_reduction <add>, %0, %cst [1] : vector<4x8x32xf32> to vector<4x32xf32>
    %cst_2 = arith.constant 8.000000e+00 : f32
    %2 = vector.broadcast %cst_2 : f32 to vector<4x32xf32>
    %3 = arith.divf %1, %2 : vector<4x32xf32>
    %c0_3 = arith.constant 0 : index
    %c0_4 = arith.constant 0 : index
    %4 = vector.load %arg1[%c0_3, %c0_4] : memref<32x32xf32, #tpu.memory_space<vmem>>, vector<32x32xf32>
    %cst_5 = arith.constant dense<0.000000e+00> : vector<4x32xf32>
    %5 = tpu.matmul %3, %4, %cst_5 {dimension_numbers = #tpu.dot_dimension_numbers<[1], [0], [0], [1], [0, 0, 1, 1], [], []>} : vector<4x32xf32>, vector<32x32xf32>, vector<4x32xf32> -> vector<4x32xf32>
    %c0_6 = arith.constant 0 : index
    %c0_7 = arith.constant 0 : index
    %6 = vector.load %arg2[%c0_6, %c0_7] : memref<1x32xf32, #tpu.memory_space<vmem>>, vector<1x32xf32>
    %7 = vector.broadcast %6 : vector<1x32xf32> to vector<4x32xf32>
    %8 = arith.addf %5, %7 : vector<4x32xf32>
    %cst_8 = arith.constant 0.000000e+00 : f32
    %9 = vector.broadcast %cst_8 : f32 to vector<4x32xf32>
    %10 = arith.maximumf %8, %9 : vector<4x32xf32>
    %c0_9 = arith.constant 0 : index
    %c0_10 = arith.constant 0 : index
    %11 = vector.load %arg3[%c0_9, %c0_10] : memref<32x128xf32, #tpu.memory_space<vmem>>, vector<32x128xf32>
    %cst_11 = arith.constant dense<0.000000e+00> : vector<4x128xf32>
    %12 = tpu.matmul %10, %11, %cst_11 {dimension_numbers = #tpu.dot_dimension_numbers<[1], [0], [0], [1], [0, 0, 1, 1], [], []>} : vector<4x32xf32>, vector<32x128xf32>, vector<4x128xf32> -> vector<4x128xf32>
    %c0_12 = arith.constant 0 : index
    %c0_13 = arith.constant 0 : index
    %13 = vector.load %arg4[%c0_12, %c0_13] : memref<1x128xf32, #tpu.memory_space<vmem>>, vector<1x128xf32>
    %14 = vector.broadcast %13 : vector<1x128xf32> to vector<4x128xf32>
    %15 = arith.addf %12, %14 : vector<4x128xf32>
    %c0_14 = arith.constant 0 : index
    %c0_15 = arith.constant 0 : index
    %16 = vector.load %arg5[%c0_14, %c0_15] : memref<4x128xf32, #tpu.memory_space<vmem>>, vector<4x128xf32>
    tpu.vector_store %arg5[%c0_14, %c0_15], %15 {strides = array<i32>} : memref<4x128xf32, #tpu.memory_space<vmem>>, vector<4x128xf32>,
    return
  }
}

</mosaic_0001>

<llo_original>
// kernel: tpu_custom_call.1
$region0: #{tpu_custom_call.1}
  #allocation0 [shape = 'u32[]', space=smem, size = 0x4, offset = 0x4, fixed_abs, tag = 'smem constant byte address 0x4 - core index']
  #allocation1 [shape = 'u32[72,128]{1,0:T(1,128)}', space=vmem, size = 0x9000, scoped, tag = 'internal scratch']
  %s0 = inlined_call_operand.hbm [shape: f32[4,8,32], index: 0, kind: input, shape index: {}]
  %s1 = inlined_call_operand.hbm [shape: f32[32,32], index: 1, kind: input, shape index: {}]
  %s2 = inlined_call_operand.vmem [shape: f32[1,32], index: 2, kind: input, shape index: {}]
  %s3 = inlined_call_operand.hbm [shape: f32[32,128], index: 3, kind: input, shape index: {}]
  %s4 = inlined_call_operand.vmem [shape: f32[1,128], index: 4, kind: input, shape index: {}]
  %s5 = inlined_call_operand.hbm [shape: f32[4,128], index: 5, kind: output, shape index: {}]
  %s6 = sld [smem:[#allocation0]]
  $region42: #{tpu_custom_call.1} parent=0
    _
  %s8 = ssub.s32 1, %s6
  %s9 = scalar_select 0, %s8, %s6
  $region1: #{tpu_custom_call.1} parent=0
    #allocation2 [shape = 'u8[16384]{0}', space=vmem, size = 0x4000, scoped, tag = 'input window, operand 0, single buffered']
    #allocation3 [shape = 's32[1]{0}', space=sflag, size = 0x4, scoped, tag = 'scoped memory for tpu_custom_call.1']
    #allocation4 [shape = 's32[1]{0}', space=sflag, size = 0x4, scoped, tag = 'scoped memory for tpu_custom_call.1']
    #allocation5 [shape = 'u8[16384]{0}', space=vmem, size = 0x4000, scoped, tag = 'input window, operand 1, single buffered']
    #allocation6 [shape = 's32[1]{0}', space=sflag, size = 0x4, scoped, tag = 'scoped memory for tpu_custom_call.1']
    #allocation7 [shape = 'u8[16384]{0}', space=vmem, size = 0x4000, scoped, tag = 'input window, operand 3, single buffered']
    #allocation8 [shape = 'u8[2048]{0}', space=vmem, size = 0x800, scoped, tag = 'output window, operand 0, single buffered']
    %10 = vsyncpa [#allocation3], 0
    %11 = vsyncpa [#allocation6], 0
    %12 = vsyncpa [#allocation4], 0
    // Predicated region
    $region2: #{tpu_custom_call.1} parent=1 // pred_check
      _
    $region3: #{tpu_custom_call.1} parent=1 // pred_check_branch
      %14 = sbr.rel (0) target = $region5
    $region4: #{tpu_custom_call.1} parent=1 // pred_region
      %16 = vsyncadd [#allocation3], 0
      %s17 = sshll.u32 %s0, 4
      %s18 = int_to_ptr.hbm [resolvable:$true] %s17
      %s19 = sshll.u32 [#allocation2], 4
      %s20 = int_to_ptr.vmem [resolvable:$true] %s19
      %25 = dma.hbm_to_vmem [thread:$0]  %s18, 512, %s20, [#allocation3], 128, 128, 8
    $region5: #{tpu_custom_call.1} parent=1 // pred_fallthru
      _
    // Predicated region
    $region6: #{tpu_custom_call.1} parent=1 // pred_check
      _
    $region7: #{tpu_custom_call.1} parent=1 // pred_check_branch
      %27 = sbr.rel (0) target = $region9
    $region8: #{tpu_custom_call.1} parent=1 // pred_region
      %29 = vsyncadd [#allocation6], 0
      %s30 = sshll.u32 %s1, 4
      %s31 = int_to_ptr.hbm [resolvable:$true] %s30
      %s32 = sshll.u32 [#allocation5], 4
      %s33 = int_to_ptr.vmem [resolvable:$true] %s32
      %38 = dma.hbm_to_vmem [thread:$0]  %s31, 512, %s33, [#allocation6], 128, 128, 8
    $region9: #{tpu_custom_call.1} parent=1 // pred_fallthru
      _
    // Predicated region
    $region10: #{tpu_custom_call.1} parent=1 // pred_check
      _
    $region11: #{tpu_custom_call.1} parent=1 // pred_check_branch
      %40 = sbr.rel (0) target = $region13
    $region12: #{tpu_custom_call.1} parent=1 // pred_region
      _
    $region13: #{tpu_custom_call.1} parent=1 // pred_fallthru
      _
    // Predicated region
    $region14: #{tpu_custom_call.1} parent=1 // pred_check
      _
    $region15: #{tpu_custom_call.1} parent=1 // pred_check_branch
      %42 = sbr.rel (0) target = $region17
    $region16: #{tpu_custom_call.1} parent=1 // pred_region
      %44 = vsyncadd [#allocation6], 0
      %s45 = sshll.u32 %s3, 4
      %s46 = int_to_ptr.hbm [resolvable:$true] %s45
      %s47 = sshll.u32 [#allocation7], 4
      %s48 = int_to_ptr.vmem [resolvable:$true] %s47
      %53 = dma.hbm_to_vmem [thread:$0]  %s46, 512, %s48, [#allocation6], 128, 128, 8
    $region17: #{tpu_custom_call.1} parent=1 // pred_fallthru
      _
    // Predicated region
    $region18: #{tpu_custom_call.1} parent=1 // pred_check
      _
    $region19: #{tpu_custom_call.1} parent=1 // pred_check_branch
      %55 = sbr.rel (0) target = $region21
    $region20: #{tpu_custom_call.1} parent=1 // pred_region
      _
    $region21: #{tpu_custom_call.1} parent=1 // pred_fallthru
      _
    // Predicated region
    $region22: #{tpu_custom_call.1} parent=1 // pred_check
      _
    $region23: #{tpu_custom_call.1} parent=1 // pred_check_branch
      %57 = sbr.rel (0) target = $region25
    $region24: #{tpu_custom_call.1} parent=1 // pred_region
      %59 = dma.done [#allocation3], 512
    $region25: #{tpu_custom_call.1} parent=1 // pred_fallthru
      _
    // Predicated region
    $region26: #{tpu_custom_call.1} parent=1 // pred_check
      _
    $region27: #{tpu_custom_call.1} parent=1 // pred_check_branch
      %61 = sbr.rel (0) target = $region29
    $region28: #{tpu_custom_call.1} parent=1 // pred_region
      %63 = dma.done [#allocation6], 512
    $region29: #{tpu_custom_call.1} parent=1 // pred_fallthru
      _
    // Predicated region
    $region30: #{tpu_custom_call.1} parent=1 // pred_check
      _
    $region31: #{tpu_custom_call.1} parent=1 // pred_check_branch
      %65 = sbr.rel (0) target = $region33
    $region32: #{tpu_custom_call.1} parent=1 // pred_region
      %67 = dma.done [#allocation6], 512
    $region33: #{tpu_custom_call.1} parent=1 // pred_fallthru
      _
    %v68 = vld [vmem:[#allocation2] sm:$0xff]
    %v69 = vld [vmem:[#allocation2 + $0x8] sm:$0xff]
    %v70 = vld [vmem:[#allocation2 + $0x10] sm:$0xff]
    %v71 = vld [vmem:[#allocation2 + $0x18] sm:$0xff]
    %vm72 = vcmask 261120
    %v73 = vsel %vm72, %v68, 0.0
    %v74 = vrot.slane %v73, 4
    %v75 = vadd.f32 %v73, %v74
    %v76 = vrot.slane %v75, 2
    %v77 = vadd.f32 %v75, %v76
    %v78 = vrot.slane %v77, 1
    %v79 = vadd.f32 %v77, %v78
    %v80 = vsel %vm72, %v69, 0.0
    %v81 = vrot.slane %v80, 4
    %v82 = vadd.f32 %v80, %v81
    %v83 = vrot.slane %v82, 2
    %v84 = vadd.f32 %v82, %v83
    %v85 = vrot.slane %v84, 1
    %v86 = vadd.f32 %v84, %v85
    %v87 = vsel %vm72, %v70, 0.0
    %v88 = vrot.slane %v87, 4
    %v89 = vadd.f32 %v87, %v88
    %v90 = vrot.slane %v89, 2
    %v91 = vadd.f32 %v89, %v90
    %v92 = vrot.slane %v91, 1
    %v93 = vadd.f32 %v91, %v92
    %v94 = vsel %vm72, %v71, 0.0
    %v95 = vrot.slane %v94, 4
    %v96 = vadd.f32 %v94, %v95
    %v97 = vrot.slane %v96, 2
    %v98 = vadd.f32 %v96, %v97
    %v99 = vrot.slane %v98, 1
    %v100 = vadd.f32 %v98, %v99
    %v101 = vrcp.pop 8.0
    %v102 = vmul.f32 8.0, %v101
    %v103 = vsub.f32 1.0, %v102
    %v104 = vmul.f32 %v101, %v103
    %v105 = vadd.f32 %v101, %v104
    %vm106 = vweird.f32 %v101
    %v107 = vsel %vm106, %v101, %v105
    %v108 = vmul.f32 %v79, %v107
    %v109 = vmul.f32 %v86, %v107
    %v110 = vmul.f32 %v93, %v107
    %v111 = vmul.f32 %v100, %v107
    %v112 = vld [vmem:[#allocation5] sm:$0xff]
    %v113 = vld [vmem:[#allocation5 + $0x8] sm:$0xff]
    %v114 = vld [vmem:[#allocation5 + $0x10] sm:$0xff]
    %v115 = vld [vmem:[#allocation5 + $0x18] sm:$0xff]
    %v116 = vld [vmem:[%s2] sm:$0x1]
    %v118 = vperm.slane %v116, 0
    %vm124 = vcmask 1041409
    %v125 = vsel %vm124, %v109, %v108
    %vm126 = vcmask 1042434
    %v127 = vsel %vm126, %v110, %v125
    %vm128 = vcmask 1043459
    %v129 = vsel %vm128, %v111, %v127
    %v130 = vsel %vm72, %v129, 0
    %132 = vmatpush.msra.mxu0 0.0
    %133 = vmatpush.msra.mxu0 0.0
    %134 = vmatpush.msra.mxu0 0.0
    %135 = vmatpush.msra.mxu0 0.0
    %136 = vmatpush.msra.mxu0 0.0
    %137 = vmatpush.msra.mxu0 0.0
    %138 = vmatpush.msra.mxu0 0.0
    %139 = vmatpush.msra.mxu0 0.0
    %140 = vmatpush.msra.mxu0 0.0
    %141 = vmatpush.msra.mxu0 0.0
    %142 = vmatpush.msra.mxu0 0.0
    %143 = vmatpush.msra.mxu0 0.0
    %144 = vmatpush.msra.mxu0 %v115
    %145 = vmatpush.msra.mxu0 %v114
    %146 = vmatpush.msra.mxu0 %v113
    %147 = vmatpush.msra.mxu0 %v112
    %148 = vmatmul.f32.gmra.mxu0 %v130
    %v149 = vpop.f32.mrf.mxu0
    %v150 = vadd.f32 %v118, %v149
    %151 = vdwg.mxu0
    %v152 = vmax.f32 %v150, 0.0
    %v153 = vld [vmem:[#allocation7] sm:$0xff]
    %v154 = vld [vmem:[#allocation7 + $0x8] sm:$0xff]
    %v155 = vld [vmem:[#allocation7 + $0x10] sm:$0xff]
    %v156 = vld [vmem:[#allocation7 + $0x18] sm:$0xff]
    %v157 = vld [vmem:[%s4] sm:$0x1]
    %v159 = vperm.slane %v157, 0
    %v162 = vsel %vm72, %v152, 0
    %164 = vmatpush.msra.mxu0 0.0
    %165 = vmatpush.msra.mxu0 0.0
    %166 = vmatpush.msra.mxu0 0.0
    %167 = vmatpush.msra.mxu0 0.0
    %168 = vmatpush.msra.mxu0 0.0
    %169 = vmatpush.msra.mxu0 0.0
    %170 = vmatpush.msra.mxu0 0.0
    %171 = vmatpush.msra.mxu0 0.0
    %172 = vmatpush.msra.mxu0 0.0
    %173 = vmatpush.msra.mxu0 0.0
    %174 = vmatpush.msra.mxu0 0.0
    %175 = vmatpush.msra.mxu0 0.0
    %176 = vmatpush.msra.mxu0 %v156
    %177 = vmatpush.msra.mxu0 %v155
    %178 = vmatpush.msra.mxu0 %v154
    %179 = vmatpush.msra.mxu0 %v153
    %180 = vmatmul.f32.gmra.mxu0 %v162
    %v181 = vpop.f32.mrf.mxu0
    %v182 = vadd.f32 %v159, %v181
    %183 = vdwg.mxu0
    %184 = vst [vmem:[#allocation8] sm:$0xf] %v182
    // Predicated region
    $region34: #{tpu_custom_call.1} parent=1 // pred_check
      _
    $region35: #{tpu_custom_call.1} parent=1 // pred_check_branch
      %186 = sbr.rel (0) target = $region37
    $region36: #{tpu_custom_call.1} parent=1 // pred_region
      %188 = vsyncadd [#allocation4], 0
      %s190 = sshll.u32 [#allocation8], 4
      %s191 = int_to_ptr.vmem [resolvable:$true] %s190
      %s192 = sshll.u32 %s5, 4
      %s193 = int_to_ptr.hbm [resolvable:$true] %s192
      %195 = dma.vmem_to_hbm [thread:$0]  %s191, 64, %s193, [#allocation4]
    $region37: #{tpu_custom_call.1} parent=1 // pred_fallthru
      _
    // Predicated region
    $region38: #{tpu_custom_call.1} parent=1 // pred_check
      _
    $region39: #{tpu_custom_call.1} parent=1 // pred_check_branch
      %197 = sbr.rel (0) target = $region41
    $region40: #{tpu_custom_call.1} parent=1 // pred_region
      %199 = dma.done [#allocation4], 64
    $region41: #{tpu_custom_call.1} parent=1 // pred_fallthru
      _
    %200 = vsyncpa [#allocation3], 1
    %201 = vsyncpa [#allocation6], 1
    %202 = vsyncpa [#allocation4], 1

</llo_original>
